<compile_context>
chip_gen: v6e
topology: v6e:2x2x1
jax: 0.10.0
libtpu: 0.0.40
codegen_flags: <defaults>
</compile_context>

<pallas_src>
import functools

import jax
import jax.numpy as jnp
from jax import lax
from jax.experimental import pallas as pl
from jax.experimental.pallas import tpu as pltpu

TINY_NUMBER = 1e-6

_LANE = 512                       # lane-dense block width (multiple of 128)
_TARGET_BLOCK_ROWS = 1024         # ~2 MiB f32 per rgb input per grid step
_PALLAS_MIN_ELEMENTS = 1 << 16    # below this, XLA's fused reduce is already at roofline


def _masked_sq_kernel(pred_ref, gt_ref, mask_ref, out_ref, *, rows, block_rows):
    """One lane-dense (block_rows, LANE) slab of the masked squared-error sum.

    pred_ref, gt_ref : (BR, L) input dtype (cast to f32 in-kernel)
    mask_ref         : (BR, L) int8 or float channel-repeated mask
    out_ref          : (1, 1, L) f32 per-lane partial sums for this block
    """
    d = pred_ref[...].astype(jnp.float32) - gt_ref[...].astype(jnp.float32)
    m = mask_ref[...].astype(jnp.float32)
    contrib = d * d * m

    if rows % block_rows != 0:
        # The last grid block hangs past the real row count: mask the
        # out-of-bounds (unspecified) rows.  `rows` is compile-time static, so
        # this is iota + compare + select on the VPU only.
        row0 = pl.program_id(0) * block_rows
        local_row = lax.broadcasted_iota(jnp.int32, contrib.shape, 0)
        contrib = jnp.where(row0 + local_row < rows, contrib, 0.0)

    # Sublane-only per-step reduction; the cross-lane / cross-block reduce is
    # a tiny JAX epilogue over the partials array.
    out_ref[0] = jnp.sum(contrib, axis=0, keepdims=True)


@functools.partial(jax.jit, static_argnames=("lane", "target_block_rows"))
def img2mse_pallas(pred_rgb, gt_rgb, mask, *, lane=_LANE,
                   target_block_rows=_TARGET_BLOCK_ROWS):
    """Masked MSE: sum((pred-gt)^2 * mask[..., None]) / (sum(mask)*C + 1e-6)."""
    n_rays, n_ch = pred_rgb.shape

    # Compact mask dtype for the kernel feed:
    #   * floating masks keep their dtype (arbitrary weights stay exact)
    #   * bool masks shrink to int8 (small HBM traffic)
    #   * other integer masks are promoted to f32 (avoid int8 overflow)
    if jnp.issubdtype(mask.dtype, jnp.floating):
        mask_f = mask.astype(jnp.float32)
        mask_c = mask
    elif mask.dtype == jnp.bool_:
        mask_f = mask.astype(jnp.float32)
        mask_c = mask.astype(jnp.int8)
    else:
        mask_f = mask.astype(jnp.float32)
        mask_c = mask_f

    # Denominator stays in plain JAX: a tiny fused N-element reduce.  The
    # Pallas kernel only produces the numerator.
    den = jnp.sum(mask_f) * n_ch

    # Channel-repeated compact mask so the flattened rgb and mask slabs stay
    # element-aligned (sum(mask3) == sum(mask) * n_ch, but den comes from JAX).
    mask3 = jnp.broadcast_to(mask_c.reshape(n_rays, 1), (n_rays, n_ch))

    total = n_rays * n_ch
    rows = -(-total // lane)                      # static Python int under jit
    if rows <= target_block_rows:
        block_rows = rows                         # single block == full array dims
    else:
        # multiple of 32 satisfies the native tiling of f32/bf16/int8 blocks
        block_rows = max(32, (target_block_rows // 32) * 32)
    num_blocks = -(-rows // block_rows)

    # Pad only the lane remainder of the very last row (skipped entirely when
    # total is a multiple of `lane`, the typical ray-batch case).  The row
    # remainder w.r.t. block_rows is handled inside the kernel — no padded
    # full-array copies in HBM.
    pad = rows * lane - total

    def as_slab(x):
        flat = x.reshape(-1)
        if pad:
            flat = jnp.pad(flat, (0, pad))
        return flat.reshape(rows, lane)

    pred2 = as_slab(pred_rgb)
    gt2 = as_slab(gt_rgb)
    mask2 = as_slab(mask3)

    partials = pl.pallas_call(
        functools.partial(_masked_sq_kernel, rows=rows, block_rows=block_rows),
        out_shape=jax.ShapeDtypeStruct((num_blocks, 1, lane), jnp.float32),
        grid=(num_blocks,),
        in_specs=[
            pl.BlockSpec((block_rows, lane), lambda i: (i, 0)),
            pl.BlockSpec((block_rows, lane), lambda i: (i, 0)),
            pl.BlockSpec((block_rows, lane), lambda i: (i, 0)),
        ],
        out_specs=pl.BlockSpec((1, 1, lane), lambda i: (i, 0, 0)),
        compiler_params=pltpu.CompilerParams(
            # Each block writes its own partial-sum slot -> fully parallel;
            # shards across both TensorCores on v7x, no-op on v5e/v6e.
            dimension_semantics=("parallel",),
        ),
    )(pred2, gt2, mask2)

    # Tiny epilogue in plain JAX glue (also gives per-block partial summation,
    # bounding f32 accumulation error for very large N).
    num = jnp.sum(partials)
    return num / (den + TINY_NUMBER)


def img2mse(pred_rgb, gt_rgb, mask):
    """Dispatch: fused pure-JAX for tiny inputs, Pallas kernel otherwise."""
    n_rays, n_ch = pred_rgb.shape
    if n_rays * n_ch < _PALLAS_MIN_ELEMENTS:
        m = mask.astype(jnp.float32).reshape(n_rays, 1)
        diff = pred_rgb.astype(jnp.float32) - gt_rgb.astype(jnp.float32)
        return jnp.sum(diff * diff * m) / (jnp.sum(m) * n_ch + TINY_NUMBER)
    return img2mse_pallas(pred_rgb, gt_rgb, mask)


class Criterion:
    """JAX/Pallas port of GNeSF-2D Criterion (no parameters)."""

    def __call__(self, outputs, ray_batch, scalars_to_log):
        pred_rgb = outputs["rgb"]
        pred_mask = outputs["mask"]          # .float() handled inside img2mse
        gt_rgb = ray_batch["rgb"]
        loss = img2mse(pred_rgb, gt_rgb, pred_mask)
        return loss, scalars_to_log


def _ref_loss(pred_rgb, gt_rgb, mask):
    m = mask.astype(jnp.float32)
    n_ch = pred_rgb.shape[1]
    return jnp.sum((pred_rgb - gt_rgb) ** 2 * m[:, None]) / (
        jnp.sum(m) * n_ch + TINY_NUMBER
    )


if __name__ == "__main__":
    key = jax.random.PRNGKey(0)
    k1, k2, k3 = jax.random.split(key, 3)

    n_rays, n_ch = 2048, 3  # small shapes: 2048 rays, RGB channels
    pred_rgb = jax.random.uniform(k1, (n_rays, n_ch), dtype=jnp.float32)
    gt_rgb = jax.random.uniform(k2, (n_rays, n_ch), dtype=jnp.float32)
    # boolean mask, as produced upstream (outputs['mask'] is bool, .float() in torch)
    pred_mask = jax.random.uniform(k3, (n_rays,)) > 0.3

    ref = _ref_loss(pred_rgb, gt_rgb, pred_mask)

    # 1) Pallas kernel with production config (single block, no padding:
    #    total = 6144 is a multiple of LANE=512).
    loss1 = jax.block_until_ready(img2mse_pallas(pred_rgb, gt_rgb, pred_mask))
    assert jnp.allclose(loss1, ref, rtol=1e-5, atol=1e-6), (loss1, ref)

    # 2) Small blocks to exercise the multi-block parallel grid and the
    #    in-kernel row-remainder mask (rows=48, block_rows=32 -> remainder 16).
    loss2 = jax.block_until_ready(
        img2mse_pallas(pred_rgb, gt_rgb, pred_mask, lane=128, target_block_rows=32)
    )
    assert jnp.allclose(loss2, ref, rtol=1e-5, atol=1e-6), (loss2, ref)

    # 3) Non-divisible total (1000 rays * 3 = 3000 elements) to exercise the
    #    lane-remainder padding path.
    pred_s, gt_s, mask_s = pred_rgb[:1000], gt_rgb[:1000], pred_mask[:1000]
    ref_s = _ref_loss(pred_s, gt_s, mask_s)
    loss3 = jax.block_until_ready(img2mse_pallas(pred_s, gt_s, mask_s))
    assert jnp.allclose(loss3, ref_s, rtol=1e-5, atol=1e-6), (loss3, ref_s)

    # 4) Criterion forward (module-level semantics; small input takes the
    #    fused-JAX path by design).
    criterion = Criterion()
    outputs = {"rgb": pred_rgb, "mask": pred_mask}
    ray_batch = {"rgb": gt_rgb}
    loss4, scalars_to_log = criterion(outputs, ray_batch, {})
    loss4 = jax.block_until_ready(loss4)
    assert jnp.allclose(loss4, ref, rtol=1e-5, atol=1e-6), (loss4, ref)

    print("KERNEL_OK")
</pallas_src>

<mosaic_0001>
module attributes {stable_mosaic.version = 11 : i64} {
  func.func @_masked_sq_kernel(%arg0: i32, %arg1: memref<12x512xf32, #tpu.memory_space<vmem>>, %arg2: memref<12x512xf32, #tpu.memory_space<vmem>>, %arg3: memref<12x512xi8, #tpu.memory_space<vmem>>, %arg4: memref<1x1x512xf32, #tpu.memory_space<vmem>>) attributes {dimension_semantics = [#tpu.dimension_semantics<parallel>], iteration_bounds = array<i64: 1>, scalar_prefetch = 0 : i64, scratch_operands = 0 : i64, tpu.core_type = #tpu.core_type<tc>, window_params = [{transform_indices = @transform_0, window_bounds = array<i64: 12, 512>}, {transform_indices = @transform_1, window_bounds = array<i64: 12, 512>}, {transform_indices = @transform_2, window_bounds = array<i64: 12, 512>}, {transform_indices = @transform_3, window_bounds = array<i64: 1, 1, 512>}]} {
    %c0 = arith.constant 0 : index
    %c0_0 = arith.constant 0 : index
    %0 = vector.load %arg1[%c0, %c0_0] : memref<12x512xf32, #tpu.memory_space<vmem>>, vector<12x512xf32>
    %c0_1 = arith.constant 0 : index
    %c0_2 = arith.constant 0 : index
    %1 = vector.load %arg2[%c0_1, %c0_2] : memref<12x512xf32, #tpu.memory_space<vmem>>, vector<12x512xf32>
    %2 = arith.subf %0, %1 : vector<12x512xf32>
    %c0_3 = arith.constant 0 : index
    %c0_4 = arith.constant 0 : index
    %3 = vector.load %arg3[%c0_3, %c0_4] : memref<12x512xi8, #tpu.memory_space<vmem>>, vector<12x512xi8>
    %4 = arith.sitofp %3 : vector<12x512xi8> to vector<12x512xf32>
    %5 = arith.mulf %2, %2 : vector<12x512xf32>
    %6 = arith.mulf %5, %4 : vector<12x512xf32>
    %cst = arith.constant dense<0.000000e+00> : vector<512xf32>
    %7 = vector.multi_reduction <add>, %6, %cst [0] : vector<12x512xf32> to vector<512xf32>
    %8 = vector.shape_cast %7 : vector<512xf32> to vector<1x512xf32>
    %c0_5 = arith.constant 0 : index
    %c0_6 = arith.constant 0 : index
    %c0_7 = arith.constant 0 : index
    %9 = vector.load %arg4[%c0_5, %c0_6, %c0_7] : memref<1x1x512xf32, #tpu.memory_space<vmem>>, vector<1x1x512xf32>
    %10 = vector.shape_cast %9 : vector<1x1x512xf32> to vector<1x512xf32>
    %11 = vector.shape_cast %8 : vector<1x512xf32> to vector<1x1x512xf32>
    tpu.vector_store %arg4[%c0_5, %c0_6, %c0_7], %11 {strides = array<i32>} : memref<1x1x512xf32, #tpu.memory_space<vmem>>, vector<1x1x512xf32>,
    return
  }
  func.func @transform_0(%arg0: i32) -> (i32, i32) {
    %c0_i32 = arith.constant 0 : i32
    %c0_i32_0 = arith.constant 0 : i32
    return %arg0, %c0_i32 : i32, i32
  }
  func.func @transform_1(%arg0: i32) -> (i32, i32) {
    %c0_i32 = arith.constant 0 : i32
    %c0_i32_0 = arith.constant 0 : i32
    return %arg0, %c0_i32 : i32, i32
  }
  func.func @transform_2(%arg0: i32) -> (i32, i32) {
    %c0_i32 = arith.constant 0 : i32
    %c0_i32_0 = arith.constant 0 : i32
    return %arg0, %c0_i32 : i32, i32
  }
  func.func @transform_3(%arg0: i32) -> (i32, i32, i32) {
    %c0_i32 = arith.constant 0 : i32
    %c0_i32_0 = arith.constant 0 : i32
    %c0_i32_1 = arith.constant 0 : i32
    return %arg0, %c0_i32, %c0_i32_0 : i32, i32, i32
  }
}

</mosaic_0001>

<llo_original>
// kernel: img2mse_pallas.1
$region0: #{img2mse_pallas.1}
  #allocation0 [shape = 'u32[]', space=smem, size = 0x4, offset = 0x4, fixed_abs, tag = 'smem constant byte address 0x4 - core index']
  #allocation1 [shape = 'u32[144,128]{1,0:T(1,128)}', space=vmem, size = 0x12000, scoped, tag = 'internal scratch']
  %s0 = inlined_call_operand.vmem [shape: f32[12,512], index: 0, kind: input, shape index: {}]
  %s1 = inlined_call_operand.vmem [shape: f32[12,512], index: 1, kind: input, shape index: {}]
  %s2 = inlined_call_operand.vmem [shape: s8[12,512], index: 2, kind: input, shape index: {}]
  %s3 = inlined_call_operand.vmem [shape: f32[1,1,512], index: 3, kind: output, shape index: {}]
  %s4 = sld [smem:[#allocation0]]
  $region22: #{img2mse_pallas.1} parent=0
    _
  %s6 = ssub.s32 1, %s4
  %s7 = scalar_select 0, %s6, %s4
  // Predicated region
  $region2: #{img2mse_pallas.1} parent=0 // pred_check
    _
  $region3: #{img2mse_pallas.1} parent=0 // pred_check_branch
    %9 = sbr.rel (0) target = $region5
  $region4: #{img2mse_pallas.1} parent=0 // pred_region
    _
  $region5: #{img2mse_pallas.1} parent=0 // pred_fallthru
    _
  // Predicated region
  $region6: #{img2mse_pallas.1} parent=0 // pred_check
    _
  $region7: #{img2mse_pallas.1} parent=0 // pred_check_branch
    %11 = sbr.rel (0) target = $region9
  $region8: #{img2mse_pallas.1} parent=0 // pred_region
    _
  $region9: #{img2mse_pallas.1} parent=0 // pred_fallthru
    _
  // Predicated region
  $region10: #{img2mse_pallas.1} parent=0 // pred_check
    _
  $region11: #{img2mse_pallas.1} parent=0 // pred_check_branch
    %13 = sbr.rel (0) target = $region13
  $region12: #{img2mse_pallas.1} parent=0 // pred_region
    _
  $region13: #{img2mse_pallas.1} parent=0 // pred_fallthru
    _
  %v14 = vld [vmem:[%s0] sm:$0xff]
  %v15 = vld [vmem:[%s0 + $0x8] sm:$0xff]
  %v16 = vld [vmem:[%s0 + $0x10] sm:$0xff]
  %v17 = vld [vmem:[%s0 + $0x18] sm:$0xff]
  %v18 = vld [vmem:[%s0 + $0x20] sm:$0xf]
  %v19 = vld [vmem:[%s0 + $0x28] sm:$0xf]
  %v20 = vld [vmem:[%s0 + $0x30] sm:$0xf]
  %v21 = vld [vmem:[%s0 + $0x38] sm:$0xf]
  %v22 = vld [vmem:[%s1] sm:$0xff]
  %v23 = vld [vmem:[%s1 + $0x8] sm:$0xff]
  %v24 = vld [vmem:[%s1 + $0x10] sm:$0xff]
  %v25 = vld [vmem:[%s1 + $0x18] sm:$0xff]
  %v26 = vld [vmem:[%s1 + $0x20] sm:$0xf]
  %v27 = vld [vmem:[%s1 + $0x28] sm:$0xf]
  %v28 = vld [vmem:[%s1 + $0x30] sm:$0xf]
  %v29 = vld [vmem:[%s1 + $0x38] sm:$0xf]
  %v30 = vsub.f32 %v14, %v22
  %v31 = vsub.f32 %v15, %v23
  %v32 = vsub.f32 %v16, %v24
  %v33 = vsub.f32 %v17, %v25
  %v34 = vsub.f32 %v18, %v26
  %v35 = vsub.f32 %v19, %v27
  %v36 = vsub.f32 %v20, %v28
  %v37 = vsub.f32 %v21, %v29
  %v38 = vld [vmem:[%s2] sm:$0xff]
  %v39 = vld [vmem:[%s2 + $0x8] sm:$0x55]
  %v40 = vunpack.c.0.s8 %v38
  %v41 = vunpack.c.1.s8 %v38
  %v42 = vunpack.c.2.s8 %v38
  %v43 = vunpack.c.3.s8 %v38
  %v44 = vunpack.c.0.s8 %v39
  %v45 = vunpack.c.1.s8 %v39
  %v46 = vunpack.c.2.s8 %v39
  %v47 = vunpack.c.3.s8 %v39
  %v48 = vcvt.s32.f32 %v40
  %v49 = vcvt.s32.f32 %v41
  %v50 = vcvt.s32.f32 %v42
  %v51 = vcvt.s32.f32 %v43
  %v52 = vcvt.s32.f32 %v44
  %v53 = vcvt.s32.f32 %v45
  %v54 = vcvt.s32.f32 %v46
  %v55 = vcvt.s32.f32 %v47
  %v56 = vmul.f32 %v30, %v30
  %v57 = vmul.f32 %v31, %v31
  %v58 = vmul.f32 %v32, %v32
  %v59 = vmul.f32 %v33, %v33
  %v60 = vmul.f32 %v34, %v34
  %v61 = vmul.f32 %v35, %v35
  %v62 = vmul.f32 %v36, %v36
  %v63 = vmul.f32 %v37, %v37
  %v64 = vmul.f32 %v56, %v48
  %v65 = vmul.f32 %v57, %v49
  %v66 = vmul.f32 %v58, %v50
  %v67 = vmul.f32 %v59, %v51
  %v68 = vmul.f32 %v60, %v52
  %v69 = vmul.f32 %v61, %v53
  %v70 = vmul.f32 %v62, %v54
  %v71 = vmul.f32 %v63, %v55
  %vm72 = vcmask 1043456
  %v73 = vsel %vm72, %v68, 0.0
  %v74 = vadd.f32 %v64, %v73
  %v75 = vrot.slane %v74, 4
  %v76 = vadd.f32 %v74, %v75
  %v77 = vrot.slane %v76, 2
  %v78 = vadd.f32 %v76, %v77
  %v79 = vrot.slane %v78, 1
  %v80 = vadd.f32 %v78, %v79
  %v81 = vsel %vm72, %v69, 0.0
  %v82 = vadd.f32 %v65, %v81
  %v83 = vrot.slane %v82, 4
  %v84 = vadd.f32 %v82, %v83
  %v85 = vrot.slane %v84, 2
  %v86 = vadd.f32 %v84, %v85
  %v87 = vrot.slane %v86, 1
  %v88 = vadd.f32 %v86, %v87
  %v89 = vsel %vm72, %v70, 0.0
  %v90 = vadd.f32 %v66, %v89
  %v91 = vrot.slane %v90, 4
  %v92 = vadd.f32 %v90, %v91
  %v93 = vrot.slane %v92, 2
  %v94 = vadd.f32 %v92, %v93
  %v95 = vrot.slane %v94, 1
  %v96 = vadd.f32 %v94, %v95
  %v97 = vsel %vm72, %v71, 0.0
  %v98 = vadd.f32 %v67, %v97
  %v99 = vrot.slane %v98, 4
  %v100 = vadd.f32 %v98, %v99
  %v101 = vrot.slane %v100, 2
  %v102 = vadd.f32 %v100, %v101
  %v103 = vrot.slane %v102, 1
  %v104 = vadd.f32 %v102, %v103
  %v109 = vcombine.low %v80, %v88
  %v110 = vcombine.low %v96, %v104
  %v112 = vunpack.c.l.s4 1966171168
  %v113 = vunpack.c.0.s8 %v112
  %v114 = vlaneseq
  %v115 = vshrl.u32 %v114, 7
  %v116 = vsub.s32 %v113, %v115
  %v117 = vrot.slane %v109, %v116
  %v119 = vunpack.c.l.s4 1966171168
  %v120 = vunpack.c.0.s8 %v119
  %v121 = vlaneseq
  %v122 = vshrl.u32 %v121, 7
  %v123 = vsub.s32 %v120, %v122
  %v124 = vrot.slane %v110, %v123
  %v125 = vcombine.low %v117, %v124
  %v127 = vunpack.c.l.s4 1966171168
  %v128 = vunpack.c.0.s8 %v127
  %v129 = vlaneseq
  %v130 = vshrl.u32 %v129, 7
  %v131 = vsub.s32 %v128, %v130
  %v132 = vrot.slane %v125, %v131
  %v134 = vlaneseq
  %vm135 = vcmp.ge.s32.totalorder %v134, 0
  %vm136 = vcmp.lt.s32.totalorder %v134, 512
  %vm137 = vmand %vm135, %vm136
  %138 = vst.msk [vmem:[%s3] sm:$0xf] %vm137, %v132
  // Predicated region
  $region14: #{img2mse_pallas.1} parent=0 // pred_check
    _
  $region15: #{img2mse_pallas.1} parent=0 // pred_check_branch
    %140 = sbr.rel (0) target = $region17
  $region16: #{img2mse_pallas.1} parent=0 // pred_region
    _
  $region17: #{img2mse_pallas.1} parent=0 // pred_fallthru
    _
  // Predicated region
  $region18: #{img2mse_pallas.1} parent=0 // pred_check
    _
  $region19: #{img2mse_pallas.1} parent=0 // pred_check_branch
    %142 = sbr.rel (0) target = $region21
  $region20: #{img2mse_pallas.1} parent=0 // pred_region
    _
  $region21: #{img2mse_pallas.1} parent=0 // pred_fallthru
    _

</llo_original>
